<compile_context>
chip_gen: v7x
topology: tpu7x:2x2x1
jax: 0.10.0
libtpu: 0.0.40
codegen_flags: <defaults>
</compile_context>

<pallas_src>
import functools

import numpy as np
import jax
import jax.numpy as jnp
from jax import lax
from jax.experimental import pallas as pl
from jax.experimental.pallas import tpu as pltpu

_EPS = 1e-30  # guards rsqrt(0) on masked rows (padding / wrapped pairs / r=0)


def _round_up(x, m):
    return ((x + m - 1) // m) * m


def _jastrow_ee_kernel(w_ref, wm_ref, c_ref, out_ref, *, nelec, ne_s):
    """Per-batch-tile Jastrow factor, batch-on-lanes.

    w_ref  : SMEM (1,)                learnable Pade weight (scalar)
    wm_ref : VMEM (NE_s, nelec-1)     wm[i, k-1] = static weight of pair (i, i+k)
                                      (zero for padded / wrapped rows)
    c_ref  : VMEM (3, NE_s, TB)       electron coords; electrons on sublanes,
                                      batch on lanes
    out_ref: VMEM (1, TB)             exp(sum_{i<j} K(r_ij)) per batch column
    """
    w = w_ref[0]
    cx = c_ref[0]                      # (NE_s, TB)
    cy = c_ref[1]
    cz = c_ref[2]

    acc = jnp.zeros_like(cx)
    # Static unroll over pair shifts (nelec is small in QMC settings).
    for k in range(1, nelec):
        shift = ne_s - k               # == roll by -k: rolled[i] = c[(i + k) % NE_s]
        sx = pltpu.roll(cx, shift=shift, axis=0)   # XLU sublane rotate
        sy = pltpu.roll(cy, shift=shift, axis=0)
        sz = pltpu.roll(cz, shift=shift, axis=0)
        dx = cx - sx
        dy = cy - sy
        dz = cz - sz
        r2 = dx * dx + dy * dy + dz * dz
        # Pade kernel, reciprocal form:  r/(1 + w*r) = 1 / (1/r + w)
        inv_r = lax.rsqrt(r2 + _EPS)               # 1/r   (EUP)
        x = inv_r + w
        y = pl.reciprocal(x, approx=True)          # EUP seed
        y = y * (2.0 - x * y)                      # one Newton step -> f32 accurate
        acc = acc + wm_ref[:, k - 1:k] * y         # lane-broadcast (NE_s,1) weights

    # sublane reduce -> lane-dense (1, TB) row, then exp (EUP)
    out_ref[...] = jnp.exp(jnp.sum(acc, axis=0, keepdims=True))


def _choose_tb(B, ne_s, itemsize=4):
    """Batch tile: full batch when small, else a 128-multiple sized from the
    real tiled VMEM working set (fits v5e's 16 MiB scoped default)."""
    if B <= 512:
        return B                      # single tile; last dim == full array dim
    # ~18 live (NE_s, tb) f32 slabs: double-buffered coord input (2*3),
    # roll/diff/r2 intermediates (~9), accumulator + epilogue.
    per_col = 18 * ne_s * itemsize
    budget = 12 << 20
    tb = min(max(budget // per_col, 128), 2048, B)
    return max(128, (tb // 128) * 128)


def jastrow_factor_ee(pos, weight, static_weight, nelec, *, tb=None):
    """Forward pass of JastrowFactorElectronElectron (derivative=0).

    pos:           (B, nelec*3) float32
    weight:        scalar, Pade kernel variational parameter
    static_weight: (npairs,) spin-dependent static weights (triu order, i<j)
    returns:       (B, 1) float32
    """
    ndim = 3
    B = pos.shape[0]
    assert nelec >= 2
    assert pos.shape[1] == nelec * ndim
    dtype = jnp.float32
    pos = pos.astype(dtype)

    ne_s = _round_up(nelec, 8)                    # sublane-padded electron count
    itemsize = jnp.dtype(dtype).itemsize
    if tb is None:
        tb = _choose_tb(B, ne_s, itemsize)
    bp = _round_up(B, tb)
    grid = (bp // tb,)

    # --- batch-on-lanes coordinate pack (cheap XLA transpose, ~3*ne floats/sample) ---
    c = jnp.transpose(pos.reshape(B, nelec, ndim), (2, 1, 0))     # (3, nelec, B)
    if ne_s > nelec or bp > B:
        c = jnp.pad(c, ((0, 0), (0, ne_s - nelec), (0, bp - B)))  # (3, NE_s, Bp)

    # --- per-(row i, shift k) static weights, trace-time constant ---
    # NOTE: static_weight is baked at trace time (it is a fixed spin-pattern
    # buffer of the Pade kernel, not a learnable parameter).
    static_weight = np.asarray(static_weight, dtype=np.float32)
    npairs = nelec * (nelec - 1) // 2
    assert static_weight.shape[0] == npairs
    pair_idx = {}
    p = 0
    for i in range(nelec - 1):
        for j in range(i + 1, nelec):
            pair_idx[(i, j)] = p
            p += 1
    wm_np = np.zeros((ne_s, nelec - 1), dtype=np.float32)
    for k in range(1, nelec):
        for i in range(nelec - k):
            wm_np[i, k - 1] = static_weight[pair_idx[(i, i + k)]]
    wm = jnp.asarray(wm_np, dtype=dtype)

    w = jnp.asarray([weight], dtype=dtype)

    # explicit VMEM budget: double-buffered coord input + intermediates + output
    footprint = (2 * 3 * ne_s * tb + 12 * ne_s * tb + 2 * tb + ne_s * 128) * itemsize
    vmem_limit = int(min(max(2 * footprint, 16 << 20), 32 << 20))

    kernel = functools.partial(_jastrow_ee_kernel, nelec=nelec, ne_s=ne_s)

    out = pl.pallas_call(
        kernel,
        out_shape=jax.ShapeDtypeStruct((1, bp), dtype),
        grid=grid,
        in_specs=[
            pl.BlockSpec(memory_space=pltpu.MemorySpace.SMEM),        # w (scalar)
            pl.BlockSpec((ne_s, nelec - 1), lambda b: (0, 0)),        # static weights per (row, shift)
            pl.BlockSpec((ndim, ne_s, tb), lambda b: (0, 0, b)),      # coords, batch on lanes
        ],
        out_specs=pl.BlockSpec((1, tb), lambda b: (0, b)),
        compiler_params=pltpu.CompilerParams(
            dimension_semantics=("parallel",),
            vmem_limit_bytes=vmem_limit,
        ),
    )(w, wm, c)

    return out[0, :B].reshape(B, 1)


def _reference_jastrow(pos, weight, static_weight, nelec):
    """Pure-JAX reference mirroring the PyTorch module semantics."""
    ndim = 3
    B = pos.shape[0]
    xyz = pos.reshape(B, nelec, ndim)
    diff = xyz[:, :, None, :] - xyz[:, None, :, :]         # (B, ne, ne, 3)
    dist = jnp.sqrt(jnp.sum(diff * diff, axis=-1))         # (B, ne, ne)
    idx_row, idx_col = np.triu_indices(nelec, k=1)
    r = dist[:, idx_row, idx_col]                          # (B, P) triu extract
    kern = static_weight[None, :] * r / (1.0 + weight * r)
    return jnp.exp(jnp.sum(kern, axis=-1, keepdims=True))  # (B, 1)


if __name__ == "__main__":
    # Molecule-like setup: 2 spin-up + 2 spin-down electrons.
    nup, ndown = 2, 2
    nelec = nup + ndown
    ndim = 3
    B = 8

    # Deterministic parameter init (PadeJastrowKernel):
    #   weight (variational) = 1.0
    #   static_weight = 0.25 for same-spin pairs, 0.5 for opposite-spin pairs
    spins = np.array([0] * nup + [1] * ndown)
    idx_row, idx_col = np.triu_indices(nelec, k=1)
    static_weight = np.where(spins[idx_row] == spins[idx_col], 0.25, 0.5).astype(np.float32)
    weight = np.float32(1.0)

    key = jax.random.PRNGKey(0)
    pos = jax.random.normal(key, (B, nelec * ndim), dtype=jnp.float32)

    out = jastrow_factor_ee(pos, weight, static_weight, nelec)
    out = jax.block_until_ready(out)

    ref = _reference_jastrow(pos, weight, jnp.asarray(static_weight), nelec)
    assert out.shape == (B, 1)
    np.testing.assert_allclose(np.asarray(out), np.asarray(ref), rtol=2e-3, atol=2e-3)

    print("KERNEL_OK")
</pallas_src>

<mosaic_0001>
module attributes {stable_mosaic.version = 11 : i64} {
  func.func @_jastrow_ee_kernel(%arg0: i32, %arg1: memref<1xf32, #tpu.memory_space<smem>>, %arg2: memref<8x3xf32, #tpu.memory_space<vmem>>, %arg3: memref<3x8x8xf32, #tpu.memory_space<vmem>>, %arg4: memref<1x8xf32, #tpu.memory_space<vmem>>) attributes {dimension_semantics = [#tpu.dimension_semantics<parallel>], iteration_bounds = array<i64: 1>, scalar_prefetch = 0 : i64, scratch_operands = 0 : i64, tpu.core_type = #tpu.core_type<tc>, window_params = [{transform_indices = @transform_0, window_bounds = array<i64: 1>}, {pipeline_mode = #tpu.pipeline_mode<synchronous>, transform_indices = @transform_1, window_bounds = array<i64: 8, 3>}, {transform_indices = @transform_2, window_bounds = array<i64: 3, 8, 8>}, {transform_indices = @transform_3, window_bounds = array<i64: 1, 8>}]} {
    %c0 = arith.constant 0 : index
    %0 = memref.load %arg1[%c0] : memref<1xf32, #tpu.memory_space<smem>>
    %c0_0 = arith.constant 0 : index
    %c0_1 = arith.constant 0 : index
    %c0_2 = arith.constant 0 : index
    %1 = vector.load %arg3[%c0_0, %c0_1, %c0_2] : memref<3x8x8xf32, #tpu.memory_space<vmem>>, vector<1x8x8xf32>
    %2 = vector.shape_cast %1 : vector<1x8x8xf32> to vector<8x8xf32>
    %c1 = arith.constant 1 : index
    %c0_3 = arith.constant 0 : index
    %c0_4 = arith.constant 0 : index
    %3 = vector.load %arg3[%c1, %c0_3, %c0_4] : memref<3x8x8xf32, #tpu.memory_space<vmem>>, vector<1x8x8xf32>
    %4 = vector.shape_cast %3 : vector<1x8x8xf32> to vector<8x8xf32>
    %c2 = arith.constant 2 : index
    %c0_5 = arith.constant 0 : index
    %c0_6 = arith.constant 0 : index
    %5 = vector.load %arg3[%c2, %c0_5, %c0_6] : memref<3x8x8xf32, #tpu.memory_space<vmem>>, vector<1x8x8xf32>
    %6 = vector.shape_cast %5 : vector<1x8x8xf32> to vector<8x8xf32>
    %cst = arith.constant 0.000000e+00 : f32
    %7 = vector.broadcast %cst : f32 to vector<8x8xf32>
    %c7_i32 = arith.constant 7 : i32
    %8 = tpu.dynamic_rotate %2 by %c7_i32 dim 0 : vector<8x8xf32>, i32 -> vector<8x8xf32>
    %c7_i32_7 = arith.constant 7 : i32
    %9 = tpu.dynamic_rotate %4 by %c7_i32_7 dim 0 : vector<8x8xf32>, i32 -> vector<8x8xf32>
    %c7_i32_8 = arith.constant 7 : i32
    %10 = tpu.dynamic_rotate %6 by %c7_i32_8 dim 0 : vector<8x8xf32>, i32 -> vector<8x8xf32>
    %11 = arith.subf %2, %8 : vector<8x8xf32>
    %12 = arith.subf %4, %9 : vector<8x8xf32>
    %13 = arith.subf %6, %10 : vector<8x8xf32>
    %14 = arith.mulf %11, %11 : vector<8x8xf32>
    %15 = arith.mulf %12, %12 : vector<8x8xf32>
    %16 = arith.addf %14, %15 : vector<8x8xf32>
    %17 = arith.mulf %13, %13 : vector<8x8xf32>
    %18 = arith.addf %16, %17 : vector<8x8xf32>
    %cst_9 = arith.constant 1.000000e-30 : f32
    %19 = vector.broadcast %cst_9 : f32 to vector<8x8xf32>
    %20 = arith.addf %18, %19 : vector<8x8xf32>
    %21 = math.rsqrt %20 : vector<8x8xf32>
    %22 = vector.broadcast %0 : f32 to vector<8x8xf32>
    %23 = arith.addf %21, %22 : vector<8x8xf32>
    %24 = tpu.reciprocal %23 {approx = true} : vector<8x8xf32> -> vector<8x8xf32>
    %25 = arith.mulf %23, %24 : vector<8x8xf32>
    %cst_10 = arith.constant 2.000000e+00 : f32
    %26 = vector.broadcast %cst_10 : f32 to vector<8x8xf32>
    %27 = arith.subf %26, %25 : vector<8x8xf32>
    %28 = arith.mulf %24, %27 : vector<8x8xf32>
    %c0_11 = arith.constant 0 : index
    %c0_12 = arith.constant 0 : index
    %29 = vector.load %arg2[%c0_11, %c0_12] : memref<8x3xf32, #tpu.memory_space<vmem>>, vector<8x1xf32>
    %30 = vector.broadcast %29 : vector<8x1xf32> to vector<8x8xf32>
    %31 = arith.mulf %30, %28 : vector<8x8xf32>
    %32 = arith.addf %7, %31 : vector<8x8xf32>
    %c6_i32 = arith.constant 6 : i32
    %33 = tpu.dynamic_rotate %2 by %c6_i32 dim 0 : vector<8x8xf32>, i32 -> vector<8x8xf32>
    %c6_i32_13 = arith.constant 6 : i32
    %34 = tpu.dynamic_rotate %4 by %c6_i32_13 dim 0 : vector<8x8xf32>, i32 -> vector<8x8xf32>
    %c6_i32_14 = arith.constant 6 : i32
    %35 = tpu.dynamic_rotate %6 by %c6_i32_14 dim 0 : vector<8x8xf32>, i32 -> vector<8x8xf32>
    %36 = arith.subf %2, %33 : vector<8x8xf32>
    %37 = arith.subf %4, %34 : vector<8x8xf32>
    %38 = arith.subf %6, %35 : vector<8x8xf32>
    %39 = arith.mulf %36, %36 : vector<8x8xf32>
    %40 = arith.mulf %37, %37 : vector<8x8xf32>
    %41 = arith.addf %39, %40 : vector<8x8xf32>
    %42 = arith.mulf %38, %38 : vector<8x8xf32>
    %43 = arith.addf %41, %42 : vector<8x8xf32>
    %cst_15 = arith.constant 1.000000e-30 : f32
    %44 = vector.broadcast %cst_15 : f32 to vector<8x8xf32>
    %45 = arith.addf %43, %44 : vector<8x8xf32>
    %46 = math.rsqrt %45 : vector<8x8xf32>
    %47 = vector.broadcast %0 : f32 to vector<8x8xf32>
    %48 = arith.addf %46, %47 : vector<8x8xf32>
    %49 = tpu.reciprocal %48 {approx = true} : vector<8x8xf32> -> vector<8x8xf32>
    %50 = arith.mulf %48, %49 : vector<8x8xf32>
    %cst_16 = arith.constant 2.000000e+00 : f32
    %51 = vector.broadcast %cst_16 : f32 to vector<8x8xf32>
    %52 = arith.subf %51, %50 : vector<8x8xf32>
    %53 = arith.mulf %49, %52 : vector<8x8xf32>
    %c0_17 = arith.constant 0 : index
    %c1_18 = arith.constant 1 : index
    %54 = vector.load %arg2[%c0_17, %c1_18] : memref<8x3xf32, #tpu.memory_space<vmem>>, vector<8x1xf32>
    %55 = vector.broadcast %54 : vector<8x1xf32> to vector<8x8xf32>
    %56 = arith.mulf %55, %53 : vector<8x8xf32>
    %57 = arith.addf %32, %56 : vector<8x8xf32>
    %c5_i32 = arith.constant 5 : i32
    %58 = tpu.dynamic_rotate %2 by %c5_i32 dim 0 : vector<8x8xf32>, i32 -> vector<8x8xf32>
    %c5_i32_19 = arith.constant 5 : i32
    %59 = tpu.dynamic_rotate %4 by %c5_i32_19 dim 0 : vector<8x8xf32>, i32 -> vector<8x8xf32>
    %c5_i32_20 = arith.constant 5 : i32
    %60 = tpu.dynamic_rotate %6 by %c5_i32_20 dim 0 : vector<8x8xf32>, i32 -> vector<8x8xf32>
    %61 = arith.subf %2, %58 : vector<8x8xf32>
    %62 = arith.subf %4, %59 : vector<8x8xf32>
    %63 = arith.subf %6, %60 : vector<8x8xf32>
    %64 = arith.mulf %61, %61 : vector<8x8xf32>
    %65 = arith.mulf %62, %62 : vector<8x8xf32>
    %66 = arith.addf %64, %65 : vector<8x8xf32>
    %67 = arith.mulf %63, %63 : vector<8x8xf32>
    %68 = arith.addf %66, %67 : vector<8x8xf32>
    %cst_21 = arith.constant 1.000000e-30 : f32
    %69 = vector.broadcast %cst_21 : f32 to vector<8x8xf32>
    %70 = arith.addf %68, %69 : vector<8x8xf32>
    %71 = math.rsqrt %70 : vector<8x8xf32>
    %72 = vector.broadcast %0 : f32 to vector<8x8xf32>
    %73 = arith.addf %71, %72 : vector<8x8xf32>
    %74 = tpu.reciprocal %73 {approx = true} : vector<8x8xf32> -> vector<8x8xf32>
    %75 = arith.mulf %73, %74 : vector<8x8xf32>
    %cst_22 = arith.constant 2.000000e+00 : f32
    %76 = vector.broadcast %cst_22 : f32 to vector<8x8xf32>
    %77 = arith.subf %76, %75 : vector<8x8xf32>
    %78 = arith.mulf %74, %77 : vector<8x8xf32>
    %c0_23 = arith.constant 0 : index
    %c2_24 = arith.constant 2 : index
    %79 = vector.load %arg2[%c0_23, %c2_24] : memref<8x3xf32, #tpu.memory_space<vmem>>, vector<8x1xf32>
    %80 = vector.broadcast %79 : vector<8x1xf32> to vector<8x8xf32>
    %81 = arith.mulf %80, %78 : vector<8x8xf32>
    %82 = arith.addf %57, %81 : vector<8x8xf32>
    %cst_25 = arith.constant dense<0.000000e+00> : vector<8xf32>
    %83 = vector.multi_reduction <add>, %82, %cst_25 [0] : vector<8x8xf32> to vector<8xf32>
    %84 = vector.shape_cast %83 : vector<8xf32> to vector<1x8xf32>
    %85 = math.exp %84 : vector<1x8xf32>
    %c0_26 = arith.constant 0 : index
    %c0_27 = arith.constant 0 : index
    %86 = vector.load %arg4[%c0_26, %c0_27] : memref<1x8xf32, #tpu.memory_space<vmem>>, vector<1x8xf32>
    tpu.vector_store %arg4[%c0_26, %c0_27], %85 {strides = array<i32>} : memref<1x8xf32, #tpu.memory_space<vmem>>, vector<1x8xf32>,
    return
  }
  func.func @transform_0(%arg0: i32) -> i32 {
    %c0_i32 = arith.constant 0 : i32
    %c0_i32_0 = arith.constant 0 : i32
    return %c0_i32 : i32
  }
  func.func @transform_1(%arg0: i32) -> (i32, i32) {
    %c0_i32 = arith.constant 0 : i32
    %c0_i32_0 = arith.constant 0 : i32
    %c0_i32_1 = arith.constant 0 : i32
    return %c0_i32, %c0_i32_0 : i32, i32
  }
  func.func @transform_2(%arg0: i32) -> (i32, i32, i32) {
    %c0_i32 = arith.constant 0 : i32
    %c0_i32_0 = arith.constant 0 : i32
    %c0_i32_1 = arith.constant 0 : i32
    return %c0_i32, %c0_i32_0, %arg0 : i32, i32, i32
  }
  func.func @transform_3(%arg0: i32) -> (i32, i32) {
    %c0_i32 = arith.constant 0 : i32
    %c0_i32_0 = arith.constant 0 : i32
    return %c0_i32, %arg0 : i32, i32
  }
}

</mosaic_0001>

<llo_original>
// kernel: tpu_custom_call.1
$region0: #{tpu_custom_call.1}
  #allocation0 [shape = 'u32[]', space=smem, size = 0x4, offset = 0x4, fixed_abs, tag = 'smem constant byte address 0x4 - core index']
  #allocation1 [shape = 'u32[144,128]{1,0:T(1,128)}', space=vmem, size = 0x12000, scoped, tag = 'internal scratch']
  #allocation2 [shape = 'f32[1]{0:T(128)S(6)}', space=smem, size = 0x200, scoped, tag = 'scoped memory for tpu_custom_call.1']
  %s0 = inlined_call_operand.<no memory space> [shape: f32[1], index: 0, kind: input, shape index: {}]
  %s1 = inlined_call_operand.vmem [shape: f32[8,3], index: 1, kind: input, shape index: {}]
  %s2 = inlined_call_operand.hbm [shape: f32[3,8,8], index: 2, kind: input, shape index: {}]
  %s3 = inlined_call_operand.hbm [shape: f32[1,8], index: 3, kind: output, shape index: {}]
  %s4 = sld [smem:[#allocation0]]
  $region26: #{tpu_custom_call.1} parent=0
    _
  %s6 = ssub.s32 1, %s4
  %s7 = scalar_select 0, %s6, %s4
  %8 = sst [smem:[#allocation2]] %s0
  $region1: #{tpu_custom_call.1} parent=0
    #allocation3 [shape = 'u8[12288]{0}', space=vmem, size = 0x3000, scoped, tag = 'input window, operand 2, single buffered']
    #allocation4 [shape = 's32[1]{0}', space=sflag, size = 0x4, scoped, tag = 'scoped memory for tpu_custom_call.1']
    #allocation5 [shape = 's32[1]{0}', space=sflag, size = 0x4, scoped, tag = 'scoped memory for tpu_custom_call.1']
    #allocation6 [shape = 'u8[512]{0}', space=vmem, size = 0x400, scoped, tag = 'output window, operand 0, single buffered']
    %9 = vsyncpa [#allocation4], 0
    %10 = vsyncpa [#allocation5], 0
    // Predicated region
    $region2: #{tpu_custom_call.1} parent=1 // pred_check
      _
    $region3: #{tpu_custom_call.1} parent=1 // pred_check_branch
      %12 = sbr.rel (0) target = $region5
    $region4: #{tpu_custom_call.1} parent=1 // pred_region
      _
    $region5: #{tpu_custom_call.1} parent=1 // pred_fallthru
      _
    // Predicated region
    $region6: #{tpu_custom_call.1} parent=1 // pred_check
      _
    $region7: #{tpu_custom_call.1} parent=1 // pred_check_branch
      %14 = sbr.rel (0) target = $region9
    $region8: #{tpu_custom_call.1} parent=1 // pred_region
      _
    $region9: #{tpu_custom_call.1} parent=1 // pred_fallthru
      _
    // Predicated region
    $region10: #{tpu_custom_call.1} parent=1 // pred_check
      _
    $region11: #{tpu_custom_call.1} parent=1 // pred_check_branch
      %16 = sbr.rel (0) target = $region13
    $region12: #{tpu_custom_call.1} parent=1 // pred_region
      %s18 = ssub.s32 384, 384
      %19 = vsyncadd [#allocation4], %s18
      %s20 = sshll.u32 [#allocation3], 4
      %s21 = int_to_ptr.vmem [resolvable:$true] %s20
      %26 = dma.hbm_to_vmem [thread:$0]  %s2, 384, %s21, [#allocation4], 128, 128, 8
    $region13: #{tpu_custom_call.1} parent=1 // pred_fallthru
      _
    // Predicated region
    $region14: #{tpu_custom_call.1} parent=1 // pred_check
      _
    $region15: #{tpu_custom_call.1} parent=1 // pred_check_branch
      %28 = sbr.rel (0) target = $region17
    $region16: #{tpu_custom_call.1} parent=1 // pred_region
      %29 = dma.done [#allocation4], 384
    $region17: #{tpu_custom_call.1} parent=1 // pred_fallthru
      _
    %s30 = sld [smem:[#allocation2]]
    %v31 = vld [vmem:[#allocation3] sm:$0xff]
    %s32 = scalar_lea.vmem [#allocation3], 8
    %v33 = vld [vmem:[%s32] sm:$0xff]
    %s34 = scalar_lea.vmem [#allocation3], 16
    %v35 = vld [vmem:[%s34] sm:$0xff]
    %v36 = vrot.slane %v31, 1
    %v37 = vrot.slane %v33, 1
    %v38 = vrot.slane %v35, 1
    %v39 = vsub.f32 %v31, %v36
    %v40 = vsub.f32 %v33, %v37
    %v41 = vsub.f32 %v35, %v38
    %v42 = vmul.f32 %v39, %v39
    %v43 = vmul.f32 %v40, %v40
    %v44 = vadd.f32 %v42, %v43
    %v45 = vmul.f32 %v41, %v41
    %v46 = vadd.f32 %v44, %v45
    %v47 = vadd.f32 %v46, 1e-30
    %v48 = vrsqrt.pop %v47
    %v49 = vstv %s30
    %v50 = vadd.f32 %v48, %v49
    %v51 = vrcp.pop %v50
    %v52 = vmul.f32 %v50, %v51
    %v53 = vsub.f32 2.0, %v52
    %v54 = vmul.f32 %v51, %v53
    %v55 = vld [vmem:[%s1] sm:$0xff]
    %57 = vset.pattern.permute.xlu0 0
    %58 = vperm.xlu0 %57, %v55
    %v59 = vpop.permute.xlu0 %58
    %v61 = vmul.f32 %v59, %v54
    %v62 = vadd.f32 %v61, 0.0
    %v63 = vrot.slane %v31, 2
    %v64 = vrot.slane %v33, 2
    %v65 = vrot.slane %v35, 2
    %v66 = vsub.f32 %v31, %v63
    %v67 = vsub.f32 %v33, %v64
    %v68 = vsub.f32 %v35, %v65
    %v69 = vmul.f32 %v66, %v66
    %v70 = vmul.f32 %v67, %v67
    %v71 = vadd.f32 %v69, %v70
    %v72 = vmul.f32 %v68, %v68
    %v73 = vadd.f32 %v71, %v72
    %v74 = vadd.f32 %v73, 1e-30
    %v75 = vrsqrt.pop %v74
    %v76 = vadd.f32 %v75, %v49
    %v77 = vrcp.pop %v76
    %v78 = vmul.f32 %v76, %v77
    %v79 = vsub.f32 2.0, %v78
    %v80 = vmul.f32 %v77, %v79
    %81 = vset.pattern.permute.xlu0 1
    %82 = vperm.xlu0 %81, %v55
    %v83 = vpop.permute.xlu0 %82
    %v85 = vmul.f32 %v83, %v80
    %v86 = vadd.f32 %v62, %v85
    %v87 = vrot.slane %v31, 3
    %v88 = vrot.slane %v33, 3
    %v89 = vrot.slane %v35, 3
    %v90 = vsub.f32 %v31, %v87
    %v91 = vsub.f32 %v33, %v88
    %v92 = vsub.f32 %v35, %v89
    %v93 = vmul.f32 %v90, %v90
    %v94 = vmul.f32 %v91, %v91
    %v95 = vadd.f32 %v93, %v94
    %v96 = vmul.f32 %v92, %v92
    %v97 = vadd.f32 %v95, %v96
    %v98 = vadd.f32 %v97, 1e-30
    %v99 = vrsqrt.pop %v98
    %v100 = vadd.f32 %v99, %v49
    %v101 = vrcp.pop %v100
    %v102 = vmul.f32 %v100, %v101
    %v103 = vsub.f32 2.0, %v102
    %v104 = vmul.f32 %v101, %v103
    %105 = vset.pattern.permute.xlu0 2
    %106 = vperm.xlu0 %105, %v55
    %v107 = vpop.permute.xlu0 %106
    %v109 = vmul.f32 %v107, %v104
    %v110 = vadd.f32 %v86, %v109
    %vm111 = vcmask 64512
    %v112 = vsel %vm111, %v110, 0.0
    %v113 = vrot.slane %v112, 4
    %v114 = vadd.f32 %v112, %v113
    %v115 = vrot.slane %v114, 2
    %v116 = vadd.f32 %v114, %v115
    %v117 = vrot.slane %v116, 1
    %v118 = vadd.f32 %v116, %v117
    %v119 = vmul.f32 %v118, 1.442695
    %v120 = vpow.pop %v119
    %vm121 = vcmask 57344
    %122 = vst.msk [vmem:[#allocation6] sm:$0x1] %vm121, %v120
    // Predicated region
    $region18: #{tpu_custom_call.1} parent=1 // pred_check
      _
    $region19: #{tpu_custom_call.1} parent=1 // pred_check_branch
      %124 = sbr.rel (0) target = $region21
    $region20: #{tpu_custom_call.1} parent=1 // pred_region
      %s126 = ssub.s32 16, 16
      %127 = vsyncadd [#allocation5], %s126
      %s129 = sshll.u32 [#allocation6], 4
      %s130 = int_to_ptr.vmem [resolvable:$true] %s129
      %132 = dma.vmem_to_hbm [thread:$0]  %s130, 16, %s3, [#allocation5]
    $region21: #{tpu_custom_call.1} parent=1 // pred_fallthru
      _
    // Predicated region
    $region22: #{tpu_custom_call.1} parent=1 // pred_check
      _
    $region23: #{tpu_custom_call.1} parent=1 // pred_check_branch
      %134 = sbr.rel (0) target = $region25
    $region24: #{tpu_custom_call.1} parent=1 // pred_region
      %135 = dma.done [#allocation5], 16
    $region25: #{tpu_custom_call.1} parent=1 // pred_fallthru
      _
    %136 = vsyncpa [#allocation4], 1
    %137 = vsyncpa [#allocation5], 1

</llo_original>
